<compile_context>
chip_gen: v7x
topology: tpu7x:2x2x1
jax: 0.10.0
libtpu: 0.0.40
codegen_flags: <defaults>
</compile_context>

<pallas_src>
import functools

import jax
import jax.numpy as jnp
from jax.experimental import pallas as pl
from jax.experimental.pallas import tpu as pltpu


def _round_up(x, m):
    return ((x + m - 1) // m) * m


def _tdnn_kernel(x_ref, w_ref, b_ref, o_ref, *, t_tile, n_taps, dilation,
                 compute_dtype):
    """One (batch, time-tile) grid step.

    x_ref: (1, N_pad, D)      padded full sequence of this batch element
    w_ref: (K*D, C_pad)       fused weights, compute dtype
    b_ref: (1, C_pad)         f32 bias
    o_ref: (1, T_TILE, C_pad)
    """
    ti = pl.program_id(1)
    base = pl.multiple_of(ti * t_tile, 8)          # t_tile is a multiple of 8

    # im2col: K shifted (T_TILE, D) ref-slices concatenated along lanes.
    taps = [
        x_ref[0, pl.ds(base + k * dilation, t_tile), :].astype(compute_dtype)
        for k in range(n_taps)                     # static unrolled (K small)
    ]
    xk = jnp.concatenate(taps, axis=-1)            # (T_TILE, K*D)

    # Single fused MXU matmul, f32 accumulation; bias add stays f32.
    acc = jnp.dot(xk, w_ref[...], preferred_element_type=jnp.float32)
    acc = acc + b_ref[...]
    o_ref[0] = acc.astype(o_ref.dtype)             # one lane-dense store / tile


def time_dilated_conv(x_nchw, weight_pt, bias, context_size, subsample=False,
                      *, compute_dtype=jnp.bfloat16, t_tile=256):
    """
    x_nchw:    (B, 1, N, D)   -- PyTorch NCHW input
    weight_pt: (C, 1, K, D)   -- PyTorch Conv2d weight layout (C == feature_size)
    bias:      (C,)
    returns:   (B, 1, T_out, C) == torch.transpose(conv(x), 1, 3)
    """
    B, one, N, D = x_nchw.shape
    assert one == 1
    C = weight_pt.shape[0]
    if subsample:
        n_taps, dilation = 2, context_size * 2
    else:
        n_taps, dilation = 2 * context_size + 1, 1
    assert weight_pt.shape == (C, 1, n_taps, D)
    halo = (n_taps - 1) * dilation
    t_out = N - halo
    assert t_out > 0

    lane = 128
    c_pad = _round_up(C, lane)                     # lane-dense output stores
    t_tile = min(t_tile, _round_up(t_out, 8))      # sublane-aligned time tile
    num_t = pl.cdiv(t_out, t_tile)
    t_out_pad = num_t * t_tile
    n_x_pad = _round_up(t_out_pad + halo, 8)       # room for the last halo'd slice

    x = x_nchw.reshape(B, N, D)                    # drop unit channel
    if n_x_pad > N:
        x = jnp.pad(x, ((0, 0), (0, n_x_pad - N), (0, 0)))

    # (C,1,K,D) -> (K,D,C) -> fused (K*D, C) -> pad C -> MXU compute dtype.
    w = jnp.transpose(weight_pt[:, 0, :, :], (1, 2, 0)).reshape(n_taps * D, C)
    w = jnp.pad(w, ((0, 0), (0, c_pad - C))).astype(compute_dtype)
    b2 = jnp.pad(bias.reshape(1, C), ((0, 0), (0, c_pad - C))).astype(jnp.float32)

    kernel = functools.partial(_tdnn_kernel, t_tile=t_tile, n_taps=n_taps,
                               dilation=dilation, compute_dtype=compute_dtype)

    # Scheduler hint + VMEM budget derived from the real buffer footprint
    # (clamped to v7x's 64 MiB physical VMEM).
    itemsize_x = jnp.dtype(x_nchw.dtype).itemsize
    itemsize_c = jnp.dtype(compute_dtype).itemsize
    x_block_bytes = n_x_pad * D * itemsize_x
    out_tile_bytes = t_tile * c_pad * itemsize_x
    scratch_bytes = t_tile * n_taps * D * itemsize_c + t_tile * c_pad * 4
    need = (2 * (x_block_bytes + out_tile_bytes)
            + n_taps * D * c_pad * itemsize_c + c_pad * 4 + scratch_bytes)
    vmem_limit = int(min(max(32 * 1024 * 1024, 2 * need), 64 * 1024 * 1024))

    flops = 2 * B * t_out_pad * (n_taps * D) * c_pad
    bytes_accessed = (x.size * x.dtype.itemsize
                      + w.size * w.dtype.itemsize
                      + b2.size * b2.dtype.itemsize
                      + B * t_out_pad * c_pad * itemsize_x)

    out = pl.pallas_call(
        kernel,
        out_shape=jax.ShapeDtypeStruct((B, t_out_pad, c_pad), x_nchw.dtype),
        grid_spec=pltpu.PrefetchScalarGridSpec(
            num_scalar_prefetch=0,
            grid=(B, num_t),                       # time-tiles innermost
            in_specs=[
                # Full padded sequence; constant index over t => stays resident.
                pl.BlockSpec((1, n_x_pad, D), lambda b, t: (b, 0, 0)),
                pl.BlockSpec((n_taps * D, c_pad), lambda b, t: (0, 0)),
                pl.BlockSpec((1, c_pad), lambda b, t: (0, 0)),
            ],
            out_specs=pl.BlockSpec((1, t_tile, c_pad), lambda b, t: (b, t, 0)),
        ),
        compiler_params=pltpu.CompilerParams(
            dimension_semantics=("parallel", "parallel"),
            vmem_limit_bytes=vmem_limit),
        cost_estimate=pl.CostEstimate(flops=flops, transcendentals=0,
                                      bytes_accessed=bytes_accessed),
    )(x, w, b2)

    # Strip the time/channel padding and restore the (B, 1, T_out, C) layout.
    return out[:, :t_out, :C].reshape(B, 1, t_out, C)


def _reference(x_nchw, weight_pt, bias, context_size, subsample):
    """Pure-JAX f32 reference implementing the same conv + transpose."""
    B, _, N, D = x_nchw.shape
    C = weight_pt.shape[0]
    if subsample:
        n_taps, dilation = 2, context_size * 2
    else:
        n_taps, dilation = 2 * context_size + 1, 1
    t_out = N - (n_taps - 1) * dilation
    x = x_nchw[:, 0]                               # (B, N, D)
    acc = jnp.zeros((B, t_out, C), jnp.float32)
    for k in range(n_taps):
        xs = x[:, k * dilation:k * dilation + t_out, :]      # (B, T_out, D)
        wk = weight_pt[:, 0, k, :]                           # (C, D)
        acc += jnp.einsum("btd,cd->btc", xs, wk)
    acc += bias[None, None, :]
    return acc.reshape(B, 1, t_out, C).astype(x_nchw.dtype)


if __name__ == "__main__":
    key = jax.random.PRNGKey(0)
    B, N, D = 2, 16, 32            # batch, time frames, feature_size
    context_size = 2

    kx, kw1, kb1, kw2, kb2 = jax.random.split(key, 5)
    x = jax.random.normal(kx, (B, 1, N, D), dtype=jnp.float32)

    for subsample, kw, kb in ((False, kw1, kb1), (True, kw2, kb2)):
        K = 2 if subsample else 2 * context_size + 1
        weight = 0.1 * jax.random.normal(kw, (D, 1, K, D), dtype=jnp.float32)
        bias = 0.1 * jax.random.normal(kb, (D,), dtype=jnp.float32)

        y_ref = _reference(x, weight, bias, context_size, subsample)

        # f32 path (tight tolerance) and bf16 MXU path (looser tolerance).
        for compute_dtype, tol in ((jnp.float32, 1e-4), (jnp.bfloat16, 5e-2)):
            y = time_dilated_conv(x, weight, bias, context_size,
                                  subsample=subsample,
                                  compute_dtype=compute_dtype)
            y = jax.block_until_ready(y)
            assert y.shape == (B, 1, N - 2 * context_size, D), y.shape
            assert jnp.allclose(y, y_ref, atol=tol, rtol=tol), (
                f"mismatch (subsample={subsample}, dtype={compute_dtype}): "
                f"{jnp.max(jnp.abs(y - y_ref))}")

    print("KERNEL_OK")
</pallas_src>

<mosaic_0001>
module attributes {stable_mosaic.version = 11 : i64} {
  func.func @_tdnn_kernel(%arg0: i32, %arg1: i32, %arg2: memref<1x24x32xf32, #tpu.memory_space<vmem>>, %arg3: memref<160x128xf32, #tpu.memory_space<vmem>>, %arg4: memref<1x128xf32, #tpu.memory_space<vmem>>, %arg5: memref<1x16x128xf32, #tpu.memory_space<vmem>>) attributes {dimension_semantics = [#tpu.dimension_semantics<parallel>, #tpu.dimension_semantics<parallel>], iteration_bounds = array<i64: 2, 1>, scalar_prefetch = 0 : i64, scratch_operands = 0 : i64, tpu.core_type = #tpu.core_type<tc>, window_params = [{transform_indices = @transform_0, window_bounds = array<i64: 1, 24, 32>}, {pipeline_mode = #tpu.pipeline_mode<synchronous>, transform_indices = @transform_1, window_bounds = array<i64: 160, 128>}, {pipeline_mode = #tpu.pipeline_mode<synchronous>, transform_indices = @transform_2, window_bounds = array<i64: 1, 128>}, {transform_indices = @transform_3, window_bounds = array<i64: 1, 16, 128>}]} {
    %c16_i32 = arith.constant 16 : i32
    %0 = arith.muli %arg1, %c16_i32 : i32
    %1 = tpu.assume_multiple %0, 8 : i32
    %c0_i32 = arith.constant 0 : i32
    %2 = arith.addi %1, %c0_i32 : i32
    %c0 = arith.constant 0 : index
    %3 = arith.index_cast %2 : i32 to index
    %c0_0 = arith.constant 0 : index
    %4 = vector.load %arg2[%c0, %3, %c0_0] : memref<1x24x32xf32, #tpu.memory_space<vmem>>, vector<1x16x32xf32>
    %5 = vector.shape_cast %4 : vector<1x16x32xf32> to vector<16x32xf32>
    %c1_i32 = arith.constant 1 : i32
    %6 = arith.addi %1, %c1_i32 : i32
    %c0_1 = arith.constant 0 : index
    %7 = arith.index_cast %6 : i32 to index
    %c0_2 = arith.constant 0 : index
    %8 = vector.load %arg2[%c0_1, %7, %c0_2] : memref<1x24x32xf32, #tpu.memory_space<vmem>>, vector<1x16x32xf32>
    %9 = vector.shape_cast %8 : vector<1x16x32xf32> to vector<16x32xf32>
    %c2_i32 = arith.constant 2 : i32
    %10 = arith.addi %1, %c2_i32 : i32
    %c0_3 = arith.constant 0 : index
    %11 = arith.index_cast %10 : i32 to index
    %c0_4 = arith.constant 0 : index
    %12 = vector.load %arg2[%c0_3, %11, %c0_4] : memref<1x24x32xf32, #tpu.memory_space<vmem>>, vector<1x16x32xf32>
    %13 = vector.shape_cast %12 : vector<1x16x32xf32> to vector<16x32xf32>
    %c3_i32 = arith.constant 3 : i32
    %14 = arith.addi %1, %c3_i32 : i32
    %c0_5 = arith.constant 0 : index
    %15 = arith.index_cast %14 : i32 to index
    %c0_6 = arith.constant 0 : index
    %16 = vector.load %arg2[%c0_5, %15, %c0_6] : memref<1x24x32xf32, #tpu.memory_space<vmem>>, vector<1x16x32xf32>
    %17 = vector.shape_cast %16 : vector<1x16x32xf32> to vector<16x32xf32>
    %c4_i32 = arith.constant 4 : i32
    %18 = arith.addi %1, %c4_i32 : i32
    %c0_7 = arith.constant 0 : index
    %19 = arith.index_cast %18 : i32 to index
    %c0_8 = arith.constant 0 : index
    %20 = vector.load %arg2[%c0_7, %19, %c0_8] : memref<1x24x32xf32, #tpu.memory_space<vmem>>, vector<1x16x32xf32>
    %21 = vector.shape_cast %20 : vector<1x16x32xf32> to vector<16x32xf32>
    %22 = tpu.concatenate %5, %9, %13, %17, %21 in 1 : vector<16x32xf32>, vector<16x32xf32>, vector<16x32xf32>, vector<16x32xf32>, vector<16x32xf32> -> vector<16x160xf32>
    %c0_9 = arith.constant 0 : index
    %c0_10 = arith.constant 0 : index
    %23 = vector.load %arg3[%c0_9, %c0_10] : memref<160x128xf32, #tpu.memory_space<vmem>>, vector<160x128xf32>
    %cst = arith.constant dense<0.000000e+00> : vector<16x128xf32>
    %24 = tpu.matmul %22, %23, %cst {dimension_numbers = #tpu.dot_dimension_numbers<[1], [0], [0], [1], [0, 0, 1, 1], [], []>} : vector<16x160xf32>, vector<160x128xf32>, vector<16x128xf32> -> vector<16x128xf32>
    %c0_11 = arith.constant 0 : index
    %c0_12 = arith.constant 0 : index
    %25 = vector.load %arg4[%c0_11, %c0_12] : memref<1x128xf32, #tpu.memory_space<vmem>>, vector<1x128xf32>
    %26 = vector.broadcast %25 : vector<1x128xf32> to vector<16x128xf32>
    %27 = arith.addf %24, %26 : vector<16x128xf32>
    %c0_13 = arith.constant 0 : index
    %c0_14 = arith.constant 0 : index
    %c0_15 = arith.constant 0 : index
    %28 = vector.load %arg5[%c0_13, %c0_14, %c0_15] : memref<1x16x128xf32, #tpu.memory_space<vmem>>, vector<1x16x128xf32>
    %29 = vector.shape_cast %28 : vector<1x16x128xf32> to vector<16x128xf32>
    %30 = vector.shape_cast %27 : vector<16x128xf32> to vector<1x16x128xf32>
    tpu.vector_store %arg5[%c0_13, %c0_14, %c0_15], %30 {strides = array<i32>} : memref<1x16x128xf32, #tpu.memory_space<vmem>>, vector<1x16x128xf32>,
    return
  }
  func.func @transform_0(%arg0: i32, %arg1: i32) -> (i32, i32, i32) {
    %c0_i32 = arith.constant 0 : i32
    %c0_i32_0 = arith.constant 0 : i32
    %c0_i32_1 = arith.constant 0 : i32
    return %arg0, %c0_i32, %c0_i32_0 : i32, i32, i32
  }
  func.func @transform_1(%arg0: i32, %arg1: i32) -> (i32, i32) {
    %c0_i32 = arith.constant 0 : i32
    %c0_i32_0 = arith.constant 0 : i32
    %c0_i32_1 = arith.constant 0 : i32
    return %c0_i32, %c0_i32_0 : i32, i32
  }
  func.func @transform_2(%arg0: i32, %arg1: i32) -> (i32, i32) {
    %c0_i32 = arith.constant 0 : i32
    %c0_i32_0 = arith.constant 0 : i32
    %c0_i32_1 = arith.constant 0 : i32
    return %c0_i32, %c0_i32_0 : i32, i32
  }
  func.func @transform_3(%arg0: i32, %arg1: i32) -> (i32, i32, i32) {
    %c0_i32 = arith.constant 0 : i32
    %c0_i32_0 = arith.constant 0 : i32
    return %arg0, %arg1, %c0_i32 : i32, i32, i32
  }
}

</mosaic_0001>

<llo_original>
// kernel: tpu_custom_call.1
$region0: #{tpu_custom_call.1}
  #allocation0 [shape = 'u32[]', space=smem, size = 0x4, offset = 0x4, fixed_abs, tag = 'smem constant byte address 0x4 - core index']
  #allocation1 [shape = 'u32[144,128]{1,0:T(1,128)}', space=vmem, size = 0x12000, scoped, tag = 'internal scratch']
  %s0 = inlined_call_operand.hbm [shape: f32[2,24,32], index: 0, kind: input, shape index: {}]
  %s1 = inlined_call_operand.hbm [shape: f32[160,128], index: 1, kind: input, shape index: {}]
  %s2 = inlined_call_operand.vmem [shape: f32[1,128], index: 2, kind: input, shape index: {}]
  %s3 = inlined_call_operand.hbm [shape: f32[2,16,128], index: 3, kind: output, shape index: {}]
  %s4 = sld [smem:[#allocation0]]
  $region53: #{tpu_custom_call.1} parent=0
    _
  %s6 = ssub.s32 1, %s4
  %s7 = scalar_select 0, %s6, %s4
  $region1: #{tpu_custom_call.1} parent=0
    #allocation2 [shape = 'u8[24576]{0}', space=vmem, size = 0x6000, scoped, tag = 'input window, operand 0']
    #allocation3 [shape = 's32[2]{0}', space=sflag, size = 0x8, scoped, tag = 'scoped memory for tpu_custom_call.1']
    #allocation4 [shape = 's32[2]{0}', space=sflag, size = 0x8, scoped, tag = 'scoped memory for tpu_custom_call.1']
    #allocation5 [shape = 'u8[81920]{0}', space=vmem, size = 0x14000, scoped, tag = 'input window, operand 1, single buffered']
    #allocation6 [shape = 's32[1]{0}', space=sflag, size = 0x4, scoped, tag = 'scoped memory for tpu_custom_call.1']
    #allocation7 [shape = 'u8[16384]{0}', space=vmem, size = 0x4000, scoped, tag = 'output window, operand 0']
    %8 = vsyncpa [#allocation3], 0
    %s9 = scalar_lea.sflag [#allocation3], 1
    %10 = vsyncpa %s9, 0
    %11 = vsyncpa [#allocation6], 0
    %12 = vsyncpa [#allocation4], 0
    %s13 = scalar_lea.sflag [#allocation4], 1
    %14 = vsyncpa %s13, 0
    loop: start=0, step=1, limit=4
    $region2: #{tpu_custom_call.1} parent=1 // loop_pre_header
      _
    $region3: #{tpu_custom_call.1} parent=1 // loop_header
      %s16 = sphi 0, %s20
      %p17 = scmp.ge.s32.totalorder %s16, 4
      %s23 = sphi 0, %s35
      %s24 = sphi 0, %s31
      %s25 = sphi 0, %s23
      %s26 = sphi 0, %s24
      %s27 = sphi 0, %s25
      %s28 = sphi 0, %s26
      %s38 = sphi 0, %s40
      %s41 = sphi 0, %s38
      %s42 = sphi 0, %s41
      %s58 = sphi 0, %s42
      %s62 = sphi 0, %s62
      %s64 = sphi 0, %s62
      %s65 = sphi 0, %s64
      %s79 = sphi 0, %s65
      %s83 = sphi 0, %s83
      %s85 = sphi 0, %s83
      %s86 = sphi 0, %s85
      %s100 = sphi 0, %s86
      %s108 = sphi 0, %s110
      %s111 = sphi 0, %s108
      %s112 = sphi 0, %s111
      %s128 = sphi 0, %s112
    $region4: #{tpu_custom_call.1} parent=1 // loop_header_branch
      %19 = sbr.rel (%p17) target = $region8
    $region5: #{tpu_custom_call.1} parent=1 // loop_body
      %s21 = ssub.s32 %s16, 1
      %s22 = ssub.s32 %s16, 2
      %s29 = sadd.s32 1, %s24
      %p30 = scmp.ge.s32.totalorder %s29, 1
      %s31 = scalar_select %p30, 0, %s29
      %s32 = sadd.s32 1, %s23
      %s33 = scalar_select %p30, %s32, %s23
      %p34 = scmp.ge.s32.totalorder %s33, 2
      %s35 = scalar_select %p34, 0, %s33
      %s36 = ssub.s32 %s23, %s35
      %p37 = scmp.eq.s32.totalorder %s36, 0
      %s39 = sadd.s32 %s38, 1
      %s40 = scalar_select %p37, %s38, %s39
      %p43 = pneg %p37
      %p44 = scmp.eq.s32.totalorder %s16, 1
      %p45 = por %p43, %p44
      %p46 = scmp.ne.s32.totalorder %s38, %s41
      %p47 = scmp.eq.s32.totalorder %s16, 0
      %p48 = por %p46, %p47
      %p49 = scmp.ne.s32.totalorder %s38, %s41
      %p50 = scmp.eq.s32.totalorder %s21, 1
      %p51 = por %p49, %p50
      %p52 = scmp.ne.s32.totalorder %s41, %s42
      %p53 = scmp.eq.s32.totalorder %s21, 0
      %p54 = por %p52, %p53
      %p55 = scmp.ne.s32.totalorder %s41, %s42
      %p56 = scmp.eq.s32.totalorder %s22, 1
      %p57 = por %p55, %p56
      %p59 = scmp.ne.s32.totalorder %s42, %s58
      %p60 = scmp.eq.s32.totalorder %s22, 0
      %p61 = por %p59, %p60
      %s63 = sadd.s32 %s62, 1
      %p66 = scmp.eq.s32.totalorder %s16, 1
      %p67 = scmp.ne.s32.totalorder %s62, %s64
      %p68 = scmp.eq.s32.totalorder %s16, 0
      %p69 = por %p67, %p68
      %p70 = scmp.ne.s32.totalorder %s62, %s64
      %p71 = scmp.eq.s32.totalorder %s21, 1
      %p72 = por %p70, %p71
      %p73 = scmp.ne.s32.totalorder %s64, %s65
      %p74 = scmp.eq.s32.totalorder %s21, 0
      %p75 = por %p73, %p74
      %p76 = scmp.ne.s32.totalorder %s64, %s65
      %p77 = scmp.eq.s32.totalorder %s22, 1
      %p78 = por %p76, %p77
      %p80 = scmp.ne.s32.totalorder %s65, %s79
      %p81 = scmp.eq.s32.totalorder %s22, 0
      %p82 = por %p80, %p81
      %s84 = sadd.s32 %s83, 1
      %p87 = scmp.eq.s32.totalorder %s16, 1
      %p88 = scmp.ne.s32.totalorder %s83, %s85
      %p89 = scmp.eq.s32.totalorder %s16, 0
      %p90 = por %p88, %p89
      %p91 = scmp.ne.s32.totalorder %s83, %s85
      %p92 = scmp.eq.s32.totalorder %s21, 1
      %p93 = por %p91, %p92
      %p94 = scmp.ne.s32.totalorder %s85, %s86
      %p95 = scmp.eq.s32.totalorder %s21, 0
      %p96 = por %p94, %p95
      %p97 = scmp.ne.s32.totalorder %s85, %s86
      %p98 = scmp.eq.s32.totalorder %s22, 1
      %p99 = por %p97, %p98
      %p101 = scmp.ne.s32.totalorder %s86, %s100
      %p102 = scmp.eq.s32.totalorder %s22, 0
      %p103 = por %p101, %p102
      %s104 = ssub.s32 %s23, %s35
      %s105 = ssub.s32 %s24, %s31
      %s106 = sor.u32 %s104, %s105
      %p107 = scmp.eq.s32.totalorder %s106, 0
      %s109 = sadd.s32 %s108, 1
      %s110 = scalar_select %p107, %s108, %s109
      %p113 = pneg %p107
      %p114 = scmp.eq.s32.totalorder %s16, 1
      %p115 = por %p113, %p114
      %p116 = scmp.ne.s32.totalorder %s108, %s111
      %p117 = scmp.eq.s32.totalorder %s16, 0
      %p118 = por %p116, %p117
      %p119 = scmp.ne.s32.totalorder %s108, %s111
      %p120 = scmp.eq.s32.totalorder %s21, 1
      %p121 = por %p119, %p120
      %p122 = scmp.ne.s32.totalorder %s111, %s112
      %p123 = scmp.eq.s32.totalorder %s21, 0
      %p124 = por %p122, %p123
      %p125 = scmp.ne.s32.totalorder %s111, %s112
      %p126 = scmp.eq.s32.totalorder %s22, 1
      %p127 = por %p125, %p126
      %p129 = scmp.ne.s32.totalorder %s112, %s128
      %p130 = scmp.eq.s32.totalorder %s22, 0
      %p131 = por %p129, %p130
      %p132 = scmp.le.s32.totalorder 1, %s16
      %p133 = scmp.lt.s32.totalorder %s16, 3
      %p134 = pnand %p132, %p133
      %p135 = pneg %p134
      // Predicated region
      $region9: #{tpu_custom_call.1} parent=5 // pred_check
        _
      $region10: #{tpu_custom_call.1} parent=5 // pred_check_branch
        %137 = sbr.rel (%p134) target = $region12
      $region11: #{tpu_custom_call.1} parent=5 // pred_region
        %s138 = ssub.s32 %s16, 1
        // Predicated region
        $region13: #{tpu_custom_call.1} parent=11 // pred_check
          %p139 = pneg %p75
        $region14: #{tpu_custom_call.1} parent=11 // pred_check_branch
          %141 = sbr.rel (%p139) target = $region16
        $region15: #{tpu_custom_call.1} parent=11 // pred_region
          %s143 = ssub.s32 2560, 2560
          %144 = vsyncadd [#allocation6], %s143
          %s145 = sshll.u32 [#allocation5], 4
          %s146 = int_to_ptr.vmem [resolvable:$true] %s145
          %151 = dma.hbm_to_vmem [thread:$0]  %s1, 2560, %s146, [#allocation6], 128, 128, 8
        $region16: #{tpu_custom_call.1} parent=11 // pred_fallthru
          _
        // Predicated region
        $region17: #{tpu_custom_call.1} parent=11 // pred_check
          %p152 = pneg %p96
        $region18: #{tpu_custom_call.1} parent=11 // pred_check_branch
          %154 = sbr.rel (%p152) target = $region20
        $region19: #{tpu_custom_call.1} parent=11 // pred_region
          _
        $region20: #{tpu_custom_call.1} parent=11 // pred_fallthru
          _
      $region12: #{tpu_custom_call.1} parent=5 // pred_fallthru
        _
      %p155 = scmp.lt.s32.totalorder %s16, 2
      // Predicated region
      $region21: #{tpu_custom_call.1} parent=5 // pred_check
        %p156 = pneg %p155
      $region22: #{tpu_custom_call.1} parent=5 // pred_check_branch
        %158 = sbr.rel (%p156) target = $region24
      $region23: #{tpu_custom_call.1} parent=5 // pred_region
        // Predicated region
        $region25: #{tpu_custom_call.1} parent=23 // pred_check
          %p159 = pneg %p48
        $region26: #{tpu_custom_call.1} parent=23 // pred_check_branch
          %161 = sbr.rel (%p159) target = $region28
        $region27: #{tpu_custom_call.1} parent=23 // pred_region
          %s162 = sand.u32 %s38, 1
          %s163 = scalar_lea.sflag [#allocation3], %s162
          %s164 = sand.u32 %s38, 1
          %s165 = smul.addr %s164, 24
          %s166 = scalar_lea.vmem [#allocation2], %s165
          %s168 = ssub.s32 384, 384
          %169 = vsyncadd %s163, %s168
          %s170 = smul.addr %s23, 3
          %s171 = smul.addr %s170, 128
          %s172 = scalar_lea.hbm %s0, %s171
          %s173 = sshll.u32 %s166, 4
          %s174 = int_to_ptr.vmem [resolvable:$true] %s173
          %179 = dma.hbm_to_vmem [thread:$0]  %s172, 384, %s174, %s163, 128, 128, 8
        $region28: #{tpu_custom_call.1} parent=23 // pred_fallthru
          _
      $region24: #{tpu_custom_call.1} parent=5 // pred_fallthru
        _
      %p180 = scmp.le.s32.totalorder 1, %s16
      %p181 = scmp.lt.s32.totalorder %s16, 3
      %p182 = pnand %p180, %p181
      %p183 = pneg %p182
      // Predicated region
      $region29: #{tpu_custom_call.1} parent=5 // pred_check
        _
      $region30: #{tpu_custom_call.1} parent=5 // pred_check_branch
        %185 = sbr.rel (%p182) target = $region32
      $region31: #{tpu_custom_call.1} parent=5 // pred_region
        %s186 = ssub.s32 %s16, 1
        %s187 = sand.u32 %s41, 1
        %s188 = scalar_lea.sflag [#allocation3], %s187
        %s189 = sand.u32 %s41, 1
        %s190 = smul.addr %s189, 24
        %s191 = scalar_lea.vmem [#allocation2], %s190
        // Predicated region
        $region33: #{tpu_custom_call.1} parent=31 // pred_check
          %p192 = pneg %p54
        $region34: #{tpu_custom_call.1} parent=31 // pred_check_branch
          %194 = sbr.rel (%p192) target = $region36
        $region35: #{tpu_custom_call.1} parent=31 // pred_region
          %195 = dma.done %s188, 384
        $region36: #{tpu_custom_call.1} parent=31 // pred_fallthru
          _
        // Predicated region
        $region37: #{tpu_custom_call.1} parent=31 // pred_check
          %p196 = pneg %p75
        $region38: #{tpu_custom_call.1} parent=31 // pred_check_branch
          %198 = sbr.rel (%p196) target = $region40
        $region39: #{tpu_custom_call.1} parent=31 // pred_region
          %199 = dma.done [#allocation6], 2560
        $region40: #{tpu_custom_call.1} parent=31 // pred_fallthru
          _
        %s200 = sand.u32 %s41, 1
        %s201 = scalar_lea.sflag [#allocation3], %s200
        %s202 = sand.u32 %s41, 1
        %s203 = smul.addr %s202, 24
        %s204 = scalar_lea.vmem [#allocation2], %s203
        %p205 = pneg %p54
        %p206 = pneg %p51
        %p207 = pneg %p75
        %p208 = pneg %p72
        %p209 = pneg %p96
        %p210 = pneg %p93
        %p211 = pneg %p124
        %p212 = pneg %p121
        %s213 = sand.u32 %s111, 1
        %s214 = scalar_lea.sflag [#allocation4], %s213
        %s215 = sand.u32 %s111, 1
        %s216 = smul.addr %s215, 16
        %s217 = scalar_lea.vmem [#allocation7], %s216
        %s218 = smul.u32 2, %s26
        %s219 = smul.u32 %s26, 16
        %s220 = scalar_lea.vmem %s191, %s219 [#allocation2]
        %v221 = vld [vmem:[%s220] sm:$0xff]
        %v222 = vld [vmem:[%s220 + $0x8] sm:$0xff]
        %s223 = sadd.s32 %s219, 1
        %s224 = scalar_lea.vmem %s191, %s223 [#allocation2]
        %v225 = vld [vmem:[%s224] sm:$0xff]
        %v226 = vld [vmem:[%s224 + $0x8] sm:$0xff]
        %s227 = sadd.s32 %s219, 2
        %s228 = scalar_lea.vmem %s191, %s227 [#allocation2]
        %v229 = vld [vmem:[%s228] sm:$0xff]
        %v230 = vld [vmem:[%s228 + $0x8] sm:$0xff]
        %s231 = sadd.s32 %s219, 3
        %s232 = scalar_lea.vmem %s191, %s231 [#allocation2]
        %v233 = vld [vmem:[%s232] sm:$0xff]
        %v234 = vld [vmem:[%s232 + $0x8] sm:$0xff]
        %s235 = sadd.s32 %s219, 4
        %s236 = scalar_lea.vmem %s191, %s235 [#allocation2]
        %v237 = vld [vmem:[%s236] sm:$0xff]
        %v238 = vld [vmem:[%s236 + $0x8] sm:$0xff]
        %241 = vrot.lane.b32.xlu0 %v225, 32
        %v242 = vpop.permute.xlu0 %241
        %243 = vrot.lane.b32.xlu0 %v226, 32
        %v244 = vpop.permute.xlu0 %243
        %249 = vrot.lane.b32.xlu0 %v229, 64
        %v250 = vpop.permute.xlu0 %249
        %251 = vrot.lane.b32.xlu0 %v230, 64
        %v252 = vpop.permute.xlu0 %251
        %257 = vrot.lane.b32.xlu0 %v233, 96
        %v258 = vpop.permute.xlu0 %257
        %259 = vrot.lane.b32.xlu0 %v234, 96
        %v260 = vpop.permute.xlu0 %259
        %vm263 = vcmask 261120
        %v264 = vsel %vm263, %v221, %v242
        %v265 = vsel %vm263, %v222, %v244
        %vm266 = vcmask 523264
        %v267 = vsel %vm266, %v264, %v250
        %v268 = vsel %vm266, %v265, %v252
        %vm269 = vcmask 785408
        %v270 = vsel %vm269, %v267, %v258
        %v271 = vsel %vm269, %v268, %v260
        %v272 = vld [vmem:[#allocation5] sm:$0xff]
        %v273 = vld [vmem:[#allocation5 + $0x8] sm:$0xff]
        %v274 = vld [vmem:[#allocation5 + $0x10] sm:$0xff]
        %v275 = vld [vmem:[#allocation5 + $0x18] sm:$0xff]
        %v276 = vld [vmem:[#allocation5 + $0x20] sm:$0xff]
        %v277 = vld [vmem:[#allocation5 + $0x28] sm:$0xff]
        %v278 = vld [vmem:[#allocation5 + $0x30] sm:$0xff]
        %v279 = vld [vmem:[#allocation5 + $0x38] sm:$0xff]
        %v280 = vld [vmem:[#allocation5 + $0x40] sm:$0xff]
        %v281 = vld [vmem:[#allocation5 + $0x48] sm:$0xff]
        %v282 = vld [vmem:[#allocation5 + $0x50] sm:$0xff]
        %v283 = vld [vmem:[#allocation5 + $0x58] sm:$0xff]
        %v284 = vld [vmem:[#allocation5 + $0x60] sm:$0xff]
        %v285 = vld [vmem:[#allocation5 + $0x68] sm:$0xff]
        %v286 = vld [vmem:[#allocation5 + $0x70] sm:$0xff]
        %v287 = vld [vmem:[#allocation5 + $0x78] sm:$0xff]
        %v288 = vld [vmem:[#allocation5 + $0x80] sm:$0xff]
        %v289 = vld [vmem:[#allocation5 + $0x88] sm:$0xff]
        %v290 = vld [vmem:[#allocation5 + $0x90] sm:$0xff]
        %v291 = vld [vmem:[#allocation5 + $0x98] sm:$0xff]
        %v292 = vld [vmem:[%s2] sm:$0x1]
        %v294 = vlaneseq
        %v295 = vshrl.u32 %v294, 7
        %v296 = vsub.s32 0, %v295
        %v297 = vrot.slane %v292, %v296
        %v300 = vsel %vm263, %v237, 0
        %v303 = vsel %vm263, %v238, 0
        %305 = vmatprep.subr.mxu0 0.0
        %306 = vmatpush1.msra.mxu0 %v272
        %307 = vmatprep.subr.mxu0 0.0
        %308 = vmatpush1.msra.mxu0 %v273
        %309 = vmatprep.subr.mxu0 0.0
        %310 = vmatpush1.msra.mxu0 %v274
        %311 = vmatprep.subr.mxu0 0.0
        %312 = vmatpush1.msra.mxu0 %v275
        %313 = vmatprep.subr.mxu0 0.0
        %314 = vmatpush1.msra.mxu0 %v276
        %315 = vmatprep.subr.mxu0 0.0
        %316 = vmatpush1.msra.mxu0 %v277
        %317 = vmatprep.subr.mxu0 0.0
        %318 = vmatpush1.msra.mxu0 %v278
        %319 = vmatprep.subr.mxu0 0.0
        %320 = vmatpush1.msra.mxu0 %v279
        %321 = vmatprep.subr.mxu0 0.0
        %322 = vmatpush1.msra.mxu0 %v280
        %323 = vmatprep.subr.mxu0 0.0
        %324 = vmatpush1.msra.mxu0 %v281
        %325 = vmatprep.subr.mxu0 0.0
        %326 = vmatpush1.msra.mxu0 %v282
        %327 = vmatprep.subr.mxu0 0.0
        %328 = vmatpush1.msra.mxu0 %v283
        %329 = vmatprep.subr.mxu0 0.0
        %330 = vmatpush1.msra.mxu0 %v284
        %331 = vmatprep.subr.mxu0 0.0
        %332 = vmatpush1.msra.mxu0 %v285
        %333 = vmatprep.subr.mxu0 0.0
        %334 = vmatpush1.msra.mxu0 %v286
        %335 = vmatprep.subr.mxu0 0.0
        %336 = vmatpush1.msra.mxu0 %v287
        %337 = vmatprep.subr.mxu0 0.0
        %338 = vmatpush1.msra.mxu0 %v288
        %339 = vmatprep.subr.mxu0 0.0
        %340 = vmatpush1.msra.mxu0 %v289
        %341 = vmatprep.subr.mxu0 0.0
        %342 = vmatpush1.msra.mxu0 %v290
        %343 = vmatprep.subr.mxu0 0.0
        %344 = vmatpush1.msra.mxu0 %v291
        %345 = vmatprep.subr.mxu0 0.0
        %346 = vmatpush1.msra.mxu0 0.0
        %347 = vmatprep.subr.mxu0 0.0
        %348 = vmatpush1.msra.mxu0 0.0
        %349 = vmatprep.subr.mxu0 0.0
        %350 = vmatpush1.msra.mxu0 0.0
        %351 = vmatprep.subr.mxu0 0.0
        %352 = vmatpush1.msra.mxu0 0.0
        %353 = vmatprep.subr.mxu0 0.0
        %354 = vmatpush1.msra.mxu0 0.0
        %355 = vmatprep.subr.mxu0 0.0
        %356 = vmatpush1.msra.mxu0 0.0
        %357 = vmatprep.subr.mxu0 0.0
        %358 = vmatpush1.msra.mxu0 0.0
        %359 = vmatprep.subr.mxu0 0.0
        %360 = vmatpush1.msra.mxu0 0.0
        %361 = vmatprep.subr.mxu0 0.0
        %362 = vmatpush1.msra.mxu0 0.0
        %363 = vmatprep.subr.mxu0 0.0
        %364 = vmatpush1.msra.mxu0 0.0
        %365 = vmatprep.subr.mxu0 0.0
        %366 = vmatpush1.msra.mxu0 0.0
        %367 = vmatprep.subr.mxu0 0.0
        %368 = vmatpush1.msra.mxu0 0.0
        %369 = vmatprep.mubr.f32.mxu0 %v300
        %370 = vmatmul.mubr.f32.gmra.mrb[0].mxu0 %v270
        %v371 = vpop.f32.mrb[0].mxu0
        %v372 = vadd.f32 %v297, %v371
        %v373 = vpop.f32.mrb[0].mxu0
        %374 = vmatprep.mubr.f32.mxu0 %v303
        %375 = vmatmul.mubr.f32.gmra.mrb[0].mxu0 %v271
        %v376 = vpop.f32.mrb[0].mxu0
        %v377 = vadd.f32 %v297, %v376
        %v378 = vpop.f32.mrb[0].mxu0
        %379 = vdwg.mxu0
        %380 = vst [vmem:[%s217] sm:$0xff] %v372
        %381 = vst [vmem:[%s217 + $0x8] sm:$0xff] %v377
        %s382 = sand.u32 %s111, 1
        %s383 = scalar_lea.sflag [#allocation4], %s382
        %s384 = sand.u32 %s111, 1
        %s385 = smul.addr %s384, 16
        %s386 = scalar_lea.vmem [#allocation7], %s385
        // Predicated region
        $region41: #{tpu_custom_call.1} parent=31 // pred_check
          %p387 = pneg %p121
        $region42: #{tpu_custom_call.1} parent=31 // pred_check_branch
          %389 = sbr.rel (%p387) target = $region44
        $region43: #{tpu_custom_call.1} parent=31 // pred_region
          %s390 = smul.u32 2, %s26
          %s392 = ssub.s32 256, 256
          %393 = vsyncadd %s383, %s392
          %s394 = smul.addr %s25, 2
          %s395 = sadd.s32 %s390, %s394
          %s396 = smul.addr %s395, 128
          %s397 = scalar_lea.hbm %s3, %s396
          %s398 = sshll.u32 %s386, 4
          %s399 = int_to_ptr.vmem [resolvable:$true] %s398
          %404 = dma.vmem_to_hbm [thread:$0]  %s399, 256, %s397, %s383, 128, 128, 8
        $region44: #{tpu_custom_call.1} parent=31 // pred_fallthru
          _
      $region32: #{tpu_custom_call.1} parent=5 // pred_fallthru
        _
      %p405 = scmp.le.s32.totalorder 2, %s16
      // Predicated region
      $region45: #{tpu_custom_call.1} parent=5 // pred_check
        %p406 = pneg %p405
      $region46: #{tpu_custom_call.1} parent=5 // pred_check_branch
        %408 = sbr.rel (%p406) target = $region48
      $region47: #{tpu_custom_call.1} parent=5 // pred_region
        %s409 = ssub.s32 %s16, 2
        // Predicated region
        $region49: #{tpu_custom_call.1} parent=47 // pred_check
          %p410 = pneg %p127
        $region50: #{tpu_custom_call.1} parent=47 // pred_check_branch
          %412 = sbr.rel (%p410) target = $region52
        $region51: #{tpu_custom_call.1} parent=47 // pred_region
          %s413 = sand.u32 %s112, 1
          %s414 = scalar_lea.sflag [#allocation4], %s413
          %s415 = sand.u32 %s112, 1
          %s416 = smul.addr %s415, 16
          %s417 = scalar_lea.vmem [#allocation7], %s416
          %418 = dma.done %s414, 256
        $region52: #{tpu_custom_call.1} parent=47 // pred_fallthru
          _
      $region48: #{tpu_custom_call.1} parent=5 // pred_fallthru
        _
    $region6: #{tpu_custom_call.1} parent=1 // loop_footer
      %s20 = sadd.s32 1, %s16
    $region7: #{tpu_custom_call.1} parent=1 // loop_footer_branch
      %15 = sbr.rel target = $region3
    $region8: #{tpu_custom_call.1} parent=1 // loop_exit
      _
    %419 = vsyncpa [#allocation3], 1
    %s420 = scalar_lea.sflag [#allocation3], 1
    %421 = vsyncpa %s420, 1
    %422 = vsyncpa [#allocation6], 1
    %423 = vsyncpa [#allocation4], 1
    %s424 = scalar_lea.sflag [#allocation4], 1
    %425 = vsyncpa %s424, 1

</llo_original>
